<compile_context>
chip_gen: v5e
topology: v5e:2x2
jax: 0.10.0
libtpu: 0.0.40
codegen_flags: <defaults>
</compile_context>

<pallas_src>
import jax
import jax.numpy as jnp
from jax.experimental import pallas as pl
from jax.experimental.pallas import tpu as pltpu

_MIB = 1024 * 1024


def _patch_merging_linear_kernel(x_ref, w_ref, b_ref, o_ref):
    # x_ref: (tm, K) bf16   w_ref: (K, N) bf16   b_ref: (1, N) f32   o_ref: (tm, N)
    y = jnp.dot(x_ref[...], w_ref[...], preferred_element_type=jnp.float32)
    y = y + b_ref[...]                      # f32 bias, broadcast once per tile
    o_ref[...] = y.astype(o_ref.dtype)


def _vmem_limit_bytes():
    """Scoped-VMEM limit ~= 0.75x physical, clamped to [32, 96] MiB.

    v5e/v6e (128 MiB)   -> 96 MiB (well above the 16/32 MiB scoped default)
    v7x     (64 MiB/TC) -> 48 MiB (headroom; weight is duplicated per TC when
                                   the row axis is megacore-split)
    """
    cap = None
    try:
        cap = getattr(pltpu.get_tpu_info(), "vmem_capacity_bytes", None)
    except Exception:
        cap = None
    if not cap:
        cap = 64 * _MIB                      # conservative (v7x-sized) fallback
    return int(max(32 * _MIB, min(96 * _MIB, 0.75 * cap)))


def _choose_row_tile(M, K, N, in_itemsize, out_itemsize, vmem_limit, tm_cap=2048):
    """Row-tile size for the (M,K)@(K,N) projection.

    Per-step VMEM ~= 1x (K,N) weight (single-buffered, grid-invariant)
                   + 2x (tm,K) activation + 2x (tm,N) output (double-buffered).
    """
    budget = int(0.75 * vmem_limit)          # headroom for Mosaic internals
    fixed = K * N * in_itemsize + N * 4
    per_row = 2 * K * in_itemsize + 2 * N * out_itemsize
    avail = budget - fixed
    if avail < 256 * per_row:
        # TODO(synk): add K/N tiling (f32 accumulator + pl.when init/finalize)
        # for stages where the resident weight crowds out a >=256-row tile.
        tm = 256
    else:
        tm = min(tm_cap, avail // per_row)
    if tm >= M:
        return int(M)                        # single full block (always legal)
    for align in (256, 128, 8):              # MXU-height multiples first
        if tm >= align:
            return int(tm // align) * align
    return 8


def _projection_call(x2, wt, b2, out_dtype, tm, vmem_limit, *, conservative):
    M, K = x2.shape
    N = wt.shape[1]
    grid = (pl.cdiv(M, tm),)                 # partial last block is masked; no pad

    # Grid-invariant operands: fetched once, single VMEM buffer.
    const_kw = {} if conservative else {"pipeline_mode": pl.Buffered(1)}
    in_specs = [
        pl.BlockSpec((tm, K), lambda i: (i, 0)),                 # rows: pipelined
        pl.BlockSpec((K, N), lambda i: (0, 0), **const_kw),      # weight: resident
        pl.BlockSpec((1, N), lambda i: (0, 0), **const_kw),      # bias:   resident
    ]
    cp = {
        "dimension_semantics": ("parallel",),  # shard row tiles across v7x's 2 TCs
        "vmem_limit_bytes": int(vmem_limit),
    }
    if not conservative:
        # Let XLA fuse the unfold transpose (producer of x2) into the input DMA
        # instead of materializing an extra (M, K) round trip in HBM.
        cp["allow_input_fusion"] = [True, False, False]

    return pl.pallas_call(
        _patch_merging_linear_kernel,
        out_shape=jax.ShapeDtypeStruct((M, N), out_dtype),
        grid_spec=pl.GridSpec(
            grid=grid,
            in_specs=in_specs,
            out_specs=pl.BlockSpec((tm, N), lambda i: (i, 0)),
        ),
        compiler_params=pltpu.CompilerParams(**cp),
    )(x2, wt, b2)


def patch_merging(x, weight, bias, downscaling_factor, *,
                  compute_dtype=jnp.bfloat16, row_tile=None):
    """JAX/Pallas equivalent of PatchMerging.forward.

    x:      (B, C, H, W)
    weight: (out_channels, C*df*df)   -- PyTorch nn.Linear layout
    bias:   (out_channels,)
    returns (B, H//df, W//df, out_channels) in x.dtype
    """
    B, C, H, W = x.shape
    df = downscaling_factor
    nh, nw = H // df, W // df
    K = C * df * df
    N = weight.shape[0]
    M = B * nh * nw
    out_dtype = x.dtype

    # ---- Unfold: non-overlapping df x df patches, (c, ki, kj) flatten. Pure
    # layout plumbing.  Cast to bf16 *first* so a materialized transpose moves
    # half the bytes (and allow_input_fusion can elide it entirely under jit).
    xc = x.astype(compute_dtype)
    xp = xc.reshape(B, C, nh, df, nw, df).transpose(0, 2, 4, 1, 3, 5)  # (B,nh,nw,C,df,df)
    x2 = xp.reshape(M, K)
    # TODO(synk): fully fuse the unfold into the kernel (grid over (ki,kj) with
    # an f32 accumulator) so the activation crosses HBM exactly once even when
    # XLA declines the input fusion.

    wt = weight.astype(compute_dtype).T                # (K, N): kernel computes x2 @ wt
    b2 = bias.astype(jnp.float32).reshape(1, N)        # bias added in f32

    vmem_limit = _vmem_limit_bytes()
    if row_tile is None:
        tm = _choose_row_tile(M, K, N, x2.dtype.itemsize,
                              jnp.dtype(out_dtype).itemsize, vmem_limit)
    else:
        tm = min(int(row_tile), M)

    # Note: real Swin stages have K, N as multiples of 128 (lane-dense blocks);
    # toy sizes rely on full-array last dims to keep the BlockSpec legal.
    # Padding N up to a 128 multiple is only worth it if the store slot binds.
    try:
        out = _projection_call(x2, wt, b2, out_dtype, tm, vmem_limit,
                               conservative=False)
    except Exception:
        # Safety net: retry without pipeline_mode / input-fusion knobs.
        out = _projection_call(x2, wt, b2, out_dtype, tm, vmem_limit,
                               conservative=True)

    return out.reshape(B, nh, nw, N)


def patch_merging_ref(x, weight, bias, downscaling_factor):
    B, C, H, W = x.shape
    df = downscaling_factor
    nh, nw = H // df, W // df
    xp = x.reshape(B, C, nh, df, nw, df).transpose(0, 2, 4, 1, 3, 5)
    xp = xp.reshape(B, nh, nw, C * df * df)
    return jnp.einsum("bijk,ok->bijo", xp, weight) + bias


if __name__ == "__main__":
    root = jax.random.PRNGKey(0)

    def run_case(key, B, C, H, W, df, out_channels, row_tile=None):
        kx, kw, kb = jax.random.split(key, 3)
        in_features = C * df * df
        x = jax.random.normal(kx, (B, C, H, W), dtype=jnp.float32)
        weight = jax.random.normal(kw, (out_channels, in_features), dtype=jnp.float32)
        weight = weight * (1.0 / in_features ** 0.5)
        bias = jax.random.normal(kb, (out_channels,), dtype=jnp.float32) * 0.01

        out = patch_merging(x, weight, bias, df, row_tile=row_tile)
        out = jax.block_until_ready(out)
        ref = patch_merging_ref(x, weight, bias, df)
        assert out.shape == (B, H // df, W // df, out_channels)
        # bf16 compute path -> loosened tolerances vs the f32 reference.
        assert jnp.allclose(out, ref, atol=3e-2, rtol=3e-2), \
            float(jnp.max(jnp.abs(out - ref)))

    k1, k2 = jax.random.split(root)
    # Small shape consistent with the module: batch=2, channels=4, 16x16, df=2.
    run_case(k1, B=2, C=4, H=16, W=16, df=2, out_channels=8)
    # Multi-step grid with a masked partial last row-block (M=288, tile=128).
    run_case(k2, B=2, C=8, H=24, W=24, df=2, out_channels=64, row_tile=128)

    print("KERNEL_OK")
</pallas_src>

<mosaic_0001>
module attributes {stable_mosaic.version = 11 : i64} {
  func.func @_patch_merging_linear_kernel(%arg0: i32, %arg1: memref<128x16xbf16, #tpu.memory_space<vmem>>, %arg2: memref<16x8xbf16, #tpu.memory_space<vmem>>, %arg3: memref<1x8xf32, #tpu.memory_space<vmem>>, %arg4: memref<128x8xf32, #tpu.memory_space<vmem>>) attributes {dimension_semantics = [#tpu.dimension_semantics<parallel>], iteration_bounds = array<i64: 1>, scalar_prefetch = 0 : i64, scratch_operands = 0 : i64, tpu.core_type = #tpu.core_type<tc>, window_params = [{transform_indices = @transform_0, window_bounds = array<i64: 128, 16>}, {pipeline_mode = #tpu.pipeline_mode<synchronous>, transform_indices = @transform_1, window_bounds = array<i64: 16, 8>}, {pipeline_mode = #tpu.pipeline_mode<synchronous>, transform_indices = @transform_2, window_bounds = array<i64: 1, 8>}, {transform_indices = @transform_3, window_bounds = array<i64: 128, 8>}]} {
    %c0 = arith.constant 0 : index
    %c0_0 = arith.constant 0 : index
    %0 = vector.load %arg1[%c0, %c0_0] : memref<128x16xbf16, #tpu.memory_space<vmem>>, vector<128x16xbf16>
    %c0_1 = arith.constant 0 : index
    %c0_2 = arith.constant 0 : index
    %1 = vector.load %arg2[%c0_1, %c0_2] : memref<16x8xbf16, #tpu.memory_space<vmem>>, vector<16x8xbf16>
    %cst = arith.constant dense<0.000000e+00> : vector<128x8xf32>
    %2 = tpu.matmul %0, %1, %cst {dimension_numbers = #tpu.dot_dimension_numbers<[1], [0], [0], [1], [0, 0, 1, 1], [], []>} : vector<128x16xbf16>, vector<16x8xbf16>, vector<128x8xf32> -> vector<128x8xf32>
    %c0_3 = arith.constant 0 : index
    %c0_4 = arith.constant 0 : index
    %3 = vector.load %arg3[%c0_3, %c0_4] : memref<1x8xf32, #tpu.memory_space<vmem>>, vector<1x8xf32>
    %4 = vector.broadcast %3 : vector<1x8xf32> to vector<128x8xf32>
    %5 = arith.addf %2, %4 : vector<128x8xf32>
    %c0_5 = arith.constant 0 : index
    %c0_6 = arith.constant 0 : index
    %6 = vector.load %arg4[%c0_5, %c0_6] : memref<128x8xf32, #tpu.memory_space<vmem>>, vector<128x8xf32>
    tpu.vector_store %arg4[%c0_5, %c0_6], %5 {strides = array<i32>} : memref<128x8xf32, #tpu.memory_space<vmem>>, vector<128x8xf32>,
    return
  }
  func.func @transform_0(%arg0: i32) -> (i32, i32) {
    %c0_i32 = arith.constant 0 : i32
    %c0_i32_0 = arith.constant 0 : i32
    return %arg0, %c0_i32 : i32, i32
  }
  func.func @transform_1(%arg0: i32) -> (i32, i32) {
    %c0_i32 = arith.constant 0 : i32
    %c0_i32_0 = arith.constant 0 : i32
    %c0_i32_1 = arith.constant 0 : i32
    return %c0_i32, %c0_i32_0 : i32, i32
  }
  func.func @transform_2(%arg0: i32) -> (i32, i32) {
    %c0_i32 = arith.constant 0 : i32
    %c0_i32_0 = arith.constant 0 : i32
    %c0_i32_1 = arith.constant 0 : i32
    return %c0_i32, %c0_i32_0 : i32, i32
  }
  func.func @transform_3(%arg0: i32) -> (i32, i32) {
    %c0_i32 = arith.constant 0 : i32
    %c0_i32_0 = arith.constant 0 : i32
    return %arg0, %c0_i32 : i32, i32
  }
}

module attributes {stable_mosaic.version = 11 : i64} {
  func.func @_patch_merging_linear_kernel(%arg0: i32, %arg1: memref<128x16xbf16, #tpu.memory_space<vmem>>, %arg2: memref<16x8xbf16, #tpu.memory_space<vmem>>, %arg3: memref<1x8xf32, #tpu.memory_space<vmem>>, %arg4: memref<128x8xf32, #tpu.memory_space<vmem>>) attributes {dimension_semantics = [#tpu.dimension_semantics<parallel>], iteration_bounds = array<i64: 1>, scalar_prefetch = 0 : i64, scratch_operands = 0 : i64, tpu.core_type = #tpu.core_type<tc>, window_params = [{transform_indices = @transform_0, window_bounds = array<i64: 128, 16>}, {pipeline_mode = #tpu.pipeline_mode<synchronous>, transform_indices = @transform_1, window_bounds = array<i64: 16, 8>}, {pipeline_mode = #tpu.pipeline_mode<synchronous>, transform_indices = @transform_2, window_bounds = array<i64: 1, 8>}, {transform_indices = @transform_3, window_bounds = array<i64: 128, 8>}]} {
    %c0 = arith.constant 0 : index
    %c0_0 = arith.constant 0 : index
    %0 = vector.load %arg1[%c0, %c0_0] : memref<128x16xbf16, #tpu.memory_space<vmem>>, vector<128x16xbf16>
    %c0_1 = arith.constant 0 : index
    %c0_2 = arith.constant 0 : index
    %1 = vector.load %arg2[%c0_1, %c0_2] : memref<16x8xbf16, #tpu.memory_space<vmem>>, vector<16x8xbf16>
    %cst = arith.constant dense<0.000000e+00> : vector<128x8xf32>
    %2 = tpu.matmul %0, %1, %cst {dimension_numbers = #tpu.dot_dimension_numbers<[1], [0], [0], [1], [0, 0, 1, 1], [], []>} : vector<128x16xbf16>, vector<16x8xbf16>, vector<128x8xf32> -> vector<128x8xf32>
    %c0_3 = arith.constant 0 : index
    %c0_4 = arith.constant 0 : index
    %3 = vector.load %arg3[%c0_3, %c0_4] : memref<1x8xf32, #tpu.memory_space<vmem>>, vector<1x8xf32>
    %4 = vector.broadcast %3 : vector<1x8xf32> to vector<128x8xf32>
    %5 = arith.addf %2, %4 : vector<128x8xf32>
    %c0_5 = arith.constant 0 : index
    %c0_6 = arith.constant 0 : index
    %6 = vector.load %arg4[%c0_5, %c0_6] : memref<128x8xf32, #tpu.memory_space<vmem>>, vector<128x8xf32>
    tpu.vector_store %arg4[%c0_5, %c0_6], %5 {strides = array<i32>} : memref<128x8xf32, #tpu.memory_space<vmem>>, vector<128x8xf32>,
    return
  }
  func.func @transform_0(%arg0: i32) -> (i32, i32) {
    %c0_i32 = arith.constant 0 : i32
    %c0_i32_0 = arith.constant 0 : i32
    return %arg0, %c0_i32 : i32, i32
  }
  func.func @transform_1(%arg0: i32) -> (i32, i32) {
    %c0_i32 = arith.constant 0 : i32
    %c0_i32_0 = arith.constant 0 : i32
    %c0_i32_1 = arith.constant 0 : i32
    return %c0_i32, %c0_i32_0 : i32, i32
  }
  func.func @transform_2(%arg0: i32) -> (i32, i32) {
    %c0_i32 = arith.constant 0 : i32
    %c0_i32_0 = arith.constant 0 : i32
    %c0_i32_1 = arith.constant 0 : i32
    return %c0_i32, %c0_i32_0 : i32, i32
  }
  func.func @transform_3(%arg0: i32) -> (i32, i32) {
    %c0_i32 = arith.constant 0 : i32
    %c0_i32_0 = arith.constant 0 : i32
    return %arg0, %c0_i32 : i32, i32
  }
}

</mosaic_0001>

<llo_original>
// kernel: tpu_custom_call.1
$region0: #{tpu_custom_call.1}
  #allocation0 [shape = 'u32[]', space=smem, size = 0x4, offset = 0x4, fixed_abs, tag = 'smem constant byte address 0x4 - core index']
  #allocation1 [shape = 'u32[72,128]{1,0:T(1,128)}', space=vmem, size = 0x9000, scoped, tag = 'internal scratch']
  %s0 = inlined_call_operand.vmem [shape: bf16[128,16], index: 0, kind: input, shape index: {}]
  %s1 = inlined_call_operand.vmem [shape: bf16[16,8], index: 1, kind: input, shape index: {}]
  %s2 = inlined_call_operand.vmem [shape: f32[1,8], index: 2, kind: input, shape index: {}]
  %s3 = inlined_call_operand.vmem [shape: f32[128,8], index: 3, kind: output, shape index: {}]
  %s4 = sld [smem:[#allocation0]]
  $region22: #{tpu_custom_call.1} parent=0
    _
  %s6 = ssub.s32 1, %s4
  %s7 = scalar_select 0, %s6, %s4
  // Predicated region
  $region2: #{tpu_custom_call.1} parent=0 // pred_check
    _
  $region3: #{tpu_custom_call.1} parent=0 // pred_check_branch
    %9 = sbr.rel (0) target = $region5
  $region4: #{tpu_custom_call.1} parent=0 // pred_region
    _
  $region5: #{tpu_custom_call.1} parent=0 // pred_fallthru
    _
  // Predicated region
  $region6: #{tpu_custom_call.1} parent=0 // pred_check
    _
  $region7: #{tpu_custom_call.1} parent=0 // pred_check_branch
    %11 = sbr.rel (0) target = $region9
  $region8: #{tpu_custom_call.1} parent=0 // pred_region
    _
  $region9: #{tpu_custom_call.1} parent=0 // pred_fallthru
    _
  // Predicated region
  $region10: #{tpu_custom_call.1} parent=0 // pred_check
    _
  $region11: #{tpu_custom_call.1} parent=0 // pred_check_branch
    %13 = sbr.rel (0) target = $region13
  $region12: #{tpu_custom_call.1} parent=0 // pred_region
    _
  $region13: #{tpu_custom_call.1} parent=0 // pred_fallthru
    _
  %v15 = vld [vmem:[%s0] sm:$0xf]
  %v16 = vld [vmem:[%s0 + $0x4] sm:$0xf]
  %v17 = vld [vmem:[%s0 + $0x8] sm:$0xf]
  %v18 = vld [vmem:[%s0 + $0xc] sm:$0xf]
  %v19 = vld [vmem:[%s0 + $0x10] sm:$0xf]
  %v20 = vld [vmem:[%s0 + $0x14] sm:$0xf]
  %v21 = vld [vmem:[%s0 + $0x18] sm:$0xf]
  %v22 = vld [vmem:[%s0 + $0x1c] sm:$0xf]
  %v23 = vld [vmem:[%s0 + $0x20] sm:$0xf]
  %v24 = vld [vmem:[%s0 + $0x24] sm:$0xf]
  %v25 = vld [vmem:[%s0 + $0x28] sm:$0xf]
  %v26 = vld [vmem:[%s0 + $0x2c] sm:$0xf]
  %v27 = vld [vmem:[%s0 + $0x30] sm:$0xf]
  %v28 = vld [vmem:[%s0 + $0x34] sm:$0xf]
  %v29 = vld [vmem:[%s0 + $0x38] sm:$0xf]
  %v30 = vld [vmem:[%s0 + $0x3c] sm:$0xf]
  %v31 = vld [vmem:[%s1] sm:$0xf]
  %v32 = vld [vmem:[%s1 + $0x4] sm:$0xf]
  %v33 = vld [vmem:[%s2] sm:$0x1]
  %v35 = vperm.slane %v33, 0
  %v53 = vunpack.c.l.b16 %v15
  %v54 = vunpack.c.l.b16 %v16
  %v55 = vunpack.c.l.b16 %v17
  %v56 = vunpack.c.l.b16 %v18
  %v57 = vunpack.c.l.b16 %v19
  %v58 = vunpack.c.l.b16 %v20
  %v59 = vunpack.c.l.b16 %v21
  %v60 = vunpack.c.l.b16 %v22
  %v61 = vunpack.c.l.b16 %v23
  %v62 = vunpack.c.l.b16 %v24
  %v63 = vunpack.c.l.b16 %v25
  %v64 = vunpack.c.l.b16 %v26
  %v65 = vunpack.c.l.b16 %v27
  %v66 = vunpack.c.l.b16 %v28
  %v67 = vunpack.c.l.b16 %v29
  %v68 = vunpack.c.l.b16 %v30
  %v69 = vpack.c.b16 %v54, %v53
  %v70 = vpack.c.b16 %v56, %v55
  %v71 = vpack.c.b16 %v58, %v57
  %v72 = vpack.c.b16 %v60, %v59
  %v73 = vpack.c.b16 %v62, %v61
  %v74 = vpack.c.b16 %v64, %v63
  %v75 = vpack.c.b16 %v66, %v65
  %v76 = vpack.c.b16 %v68, %v67
  %v79 = vunpack.c.l.b16 %v31
  %v80 = vunpack.c.l.b16 %v32
  %v81 = vpack.c.b16 %v80, %v79
  %vm83 = vcmask 130048
  %v85 = vsel %vm83, %v69, 0
  %v88 = vsel %vm83, %v70, 0
  %v91 = vsel %vm83, %v71, 0
  %v94 = vsel %vm83, %v72, 0
  %v97 = vsel %vm83, %v73, 0
  %v100 = vsel %vm83, %v74, 0
  %v103 = vsel %vm83, %v75, 0
  %v106 = vsel %vm83, %v76, 0
  %108 = vmatpush.bf16.msra.mxu0 0
  %109 = vmatpush.bf16.msra.mxu0 0
  %110 = vmatpush.bf16.msra.mxu0 0
  %111 = vmatpush.bf16.msra.mxu0 0
  %112 = vmatpush.bf16.msra.mxu0 0
  %113 = vmatpush.bf16.msra.mxu0 0
  %114 = vmatpush.bf16.msra.mxu0 0
  %115 = vmatpush.bf16.msra.mxu0 %v81
  %116 = vmatmul.bf16.gmra.mxu0 %v85
  %v117 = vpop.f32.mrf.mxu0
  %v118 = vadd.f32 %v35, %v117
  %v119 = vpop.f32.mrf.mxu0
  %v120 = vadd.f32 %v35, %v119
  %121 = vmatmul.bf16.gmra.mxu0 %v88
  %v122 = vpop.f32.mrf.mxu0
  %v123 = vadd.f32 %v35, %v122
  %v124 = vpop.f32.mrf.mxu0
  %v125 = vadd.f32 %v35, %v124
  %126 = vmatmul.bf16.gmra.mxu0 %v91
  %v127 = vpop.f32.mrf.mxu0
  %v128 = vadd.f32 %v35, %v127
  %v129 = vpop.f32.mrf.mxu0
  %v130 = vadd.f32 %v35, %v129
  %131 = vmatmul.bf16.gmra.mxu0 %v94
  %v132 = vpop.f32.mrf.mxu0
  %v133 = vadd.f32 %v35, %v132
  %v134 = vpop.f32.mrf.mxu0
  %v135 = vadd.f32 %v35, %v134
  %136 = vmatmul.bf16.gmra.mxu0 %v97
  %v137 = vpop.f32.mrf.mxu0
  %v138 = vadd.f32 %v35, %v137
  %v139 = vpop.f32.mrf.mxu0
  %v140 = vadd.f32 %v35, %v139
  %141 = vmatmul.bf16.gmra.mxu0 %v100
  %v142 = vpop.f32.mrf.mxu0
  %v143 = vadd.f32 %v35, %v142
  %v144 = vpop.f32.mrf.mxu0
  %v145 = vadd.f32 %v35, %v144
  %146 = vmatmul.bf16.gmra.mxu0 %v103
  %v147 = vpop.f32.mrf.mxu0
  %v148 = vadd.f32 %v35, %v147
  %v149 = vpop.f32.mrf.mxu0
  %v150 = vadd.f32 %v35, %v149
  %151 = vmatmul.bf16.gmra.mxu0 %v106
  %v152 = vpop.f32.mrf.mxu0
  %v153 = vadd.f32 %v35, %v152
  %v154 = vpop.f32.mrf.mxu0
  %v155 = vadd.f32 %v35, %v154
  %156 = vdwg.mxu0
  %vm157 = vcmask 64512
  %158 = vst.msk [vmem:[%s3] sm:$0xff] %vm157, %v118
  %159 = vst.msk [vmem:[%s3 + $0x8] sm:$0xff] %vm157, %v120
  %160 = vst.msk [vmem:[%s3 + $0x10] sm:$0xff] %vm157, %v123
  %161 = vst.msk [vmem:[%s3 + $0x18] sm:$0xff] %vm157, %v125
  %162 = vst.msk [vmem:[%s3 + $0x20] sm:$0xff] %vm157, %v128
  %163 = vst.msk [vmem:[%s3 + $0x28] sm:$0xff] %vm157, %v130
  %164 = vst.msk [vmem:[%s3 + $0x30] sm:$0xff] %vm157, %v133
  %165 = vst.msk [vmem:[%s3 + $0x38] sm:$0xff] %vm157, %v135
  %166 = vst.msk [vmem:[%s3 + $0x40] sm:$0xff] %vm157, %v138
  %167 = vst.msk [vmem:[%s3 + $0x48] sm:$0xff] %vm157, %v140
  %168 = vst.msk [vmem:[%s3 + $0x50] sm:$0xff] %vm157, %v143
  %169 = vst.msk [vmem:[%s3 + $0x58] sm:$0xff] %vm157, %v145
  %170 = vst.msk [vmem:[%s3 + $0x60] sm:$0xff] %vm157, %v148
  %171 = vst.msk [vmem:[%s3 + $0x68] sm:$0xff] %vm157, %v150
  %172 = vst.msk [vmem:[%s3 + $0x70] sm:$0xff] %vm157, %v153
  %173 = vst.msk [vmem:[%s3 + $0x78] sm:$0xff] %vm157, %v155
  // Predicated region
  $region14: #{tpu_custom_call.1} parent=0 // pred_check
    _
  $region15: #{tpu_custom_call.1} parent=0 // pred_check_branch
    %175 = sbr.rel (0) target = $region17
  $region16: #{tpu_custom_call.1} parent=0 // pred_region
    _
  $region17: #{tpu_custom_call.1} parent=0 // pred_fallthru
    _
  // Predicated region
  $region18: #{tpu_custom_call.1} parent=0 // pred_check
    _
  $region19: #{tpu_custom_call.1} parent=0 // pred_check_branch
    %177 = sbr.rel (0) target = $region21
  $region20: #{tpu_custom_call.1} parent=0 // pred_region
    _
  $region21: #{tpu_custom_call.1} parent=0 // pred_fallthru
    _

// kernel: tpu_custom_call.1
$region0: #{tpu_custom_call.1}
  #allocation0 [shape = 'u32[]', space=smem, size = 0x4, offset = 0x4, fixed_abs, tag = 'smem constant byte address 0x4 - core index']
  #allocation1 [shape = 'u32[72,128]{1,0:T(1,128)}', space=vmem, size = 0x9000, scoped, tag = 'internal scratch']
  %s0 = inlined_call_operand.vmem [shape: bf16[128,16], index: 0, kind: input, shape index: {}]
  %s1 = inlined_call_operand.vmem [shape: bf16[16,8], index: 1, kind: input, shape index: {}]
  %s2 = inlined_call_operand.vmem [shape: f32[1,8], index: 2, kind: input, shape index: {}]
  %s3 = inlined_call_operand.vmem [shape: f32[128,8], index: 3, kind: output, shape index: {}]
  %s4 = sld [smem:[#allocation0]]
  $region22: #{tpu_custom_call.1} parent=0
    _
  %s6 = ssub.s32 1, %s4
  %s7 = scalar_select 0, %s6, %s4
  // Predicated region
  $region2: #{tpu_custom_call.1} parent=0 // pred_check
    _
  $region3: #{tpu_custom_call.1} parent=0 // pred_check_branch
    %9 = sbr.rel (0) target = $region5
  $region4: #{tpu_custom_call.1} parent=0 // pred_region
    _
  $region5: #{tpu_custom_call.1} parent=0 // pred_fallthru
    _
  // Predicated region
  $region6: #{tpu_custom_call.1} parent=0 // pred_check
    _
  $region7: #{tpu_custom_call.1} parent=0 // pred_check_branch
    %11 = sbr.rel (0) target = $region9
  $region8: #{tpu_custom_call.1} parent=0 // pred_region
    _
  $region9: #{tpu_custom_call.1} parent=0 // pred_fallthru
    _
  // Predicated region
  $region10: #{tpu_custom_call.1} parent=0 // pred_check
    _
  $region11: #{tpu_custom_call.1} parent=0 // pred_check_branch
    %13 = sbr.rel (0) target = $region13
  $region12: #{tpu_custom_call.1} parent=0 // pred_region
    _
  $region13: #{tpu_custom_call.1} parent=0 // pred_fallthru
    _
  %v15 = vld [vmem:[%s0] sm:$0xf]
  %v16 = vld [vmem:[%s0 + $0x4] sm:$0xf]
  %v17 = vld [vmem:[%s0 + $0x8] sm:$0xf]
  %v18 = vld [vmem:[%s0 + $0xc] sm:$0xf]
  %v19 = vld [vmem:[%s0 + $0x10] sm:$0xf]
  %v20 = vld [vmem:[%s0 + $0x14] sm:$0xf]
  %v21 = vld [vmem:[%s0 + $0x18] sm:$0xf]
  %v22 = vld [vmem:[%s0 + $0x1c] sm:$0xf]
  %v23 = vld [vmem:[%s0 + $0x20] sm:$0xf]
  %v24 = vld [vmem:[%s0 + $0x24] sm:$0xf]
  %v25 = vld [vmem:[%s0 + $0x28] sm:$0xf]
  %v26 = vld [vmem:[%s0 + $0x2c] sm:$0xf]
  %v27 = vld [vmem:[%s0 + $0x30] sm:$0xf]
  %v28 = vld [vmem:[%s0 + $0x34] sm:$0xf]
  %v29 = vld [vmem:[%s0 + $0x38] sm:$0xf]
  %v30 = vld [vmem:[%s0 + $0x3c] sm:$0xf]
  %v31 = vld [vmem:[%s1] sm:$0xf]
  %v32 = vld [vmem:[%s1 + $0x4] sm:$0xf]
  %v33 = vld [vmem:[%s2] sm:$0x1]
  %v35 = vperm.slane %v33, 0
  %v53 = vunpack.c.l.b16 %v15
  %v54 = vunpack.c.l.b16 %v16
  %v55 = vunpack.c.l.b16 %v17
  %v56 = vunpack.c.l.b16 %v18
  %v57 = vunpack.c.l.b16 %v19
  %v58 = vunpack.c.l.b16 %v20
  %v59 = vunpack.c.l.b16 %v21
  %v60 = vunpack.c.l.b16 %v22
  %v61 = vunpack.c.l.b16 %v23
  %v62 = vunpack.c.l.b16 %v24
  %v63 = vunpack.c.l.b16 %v25
  %v64 = vunpack.c.l.b16 %v26
  %v65 = vunpack.c.l.b16 %v27
  %v66 = vunpack.c.l.b16 %v28
  %v67 = vunpack.c.l.b16 %v29
  %v68 = vunpack.c.l.b16 %v30
  %v69 = vpack.c.b16 %v54, %v53
  %v70 = vpack.c.b16 %v56, %v55
  %v71 = vpack.c.b16 %v58, %v57
  %v72 = vpack.c.b16 %v60, %v59
  %v73 = vpack.c.b16 %v62, %v61
  %v74 = vpack.c.b16 %v64, %v63
  %v75 = vpack.c.b16 %v66, %v65
  %v76 = vpack.c.b16 %v68, %v67
  %v79 = vunpack.c.l.b16 %v31
  %v80 = vunpack.c.l.b16 %v32
  %v81 = vpack.c.b16 %v80, %v79
  %vm83 = vcmask 130048
  %v85 = vsel %vm83, %v69, 0
  %v88 = vsel %vm83, %v70, 0
  %v91 = vsel %vm83, %v71, 0
  %v94 = vsel %vm83, %v72, 0
  %v97 = vsel %vm83, %v73, 0
  %v100 = vsel %vm83, %v74, 0
  %v103 = vsel %vm83, %v75, 0
  %v106 = vsel %vm83, %v76, 0
  %108 = vmatpush.bf16.msra.mxu0 0
  %109 = vmatpush.bf16.msra.mxu0 0
  %110 = vmatpush.bf16.msra.mxu0 0
  %111 = vmatpush.bf16.msra.mxu0 0
  %112 = vmatpush.bf16.msra.mxu0 0
  %113 = vmatpush.bf16.msra.mxu0 0
  %114 = vmatpush.bf16.msra.mxu0 0
  %115 = vmatpush.bf16.msra.mxu0 %v81
  %116 = vmatmul.bf16.gmra.mxu0 %v85
  %v117 = vpop.f32.mrf.mxu0
  %v118 = vadd.f32 %v35, %v117
  %v119 = vpop.f32.mrf.mxu0
  %v120 = vadd.f32 %v35, %v119
  %121 = vmatmul.bf16.gmra.mxu0 %v88
  %v122 = vpop.f32.mrf.mxu0
  %v123 = vadd.f32 %v35, %v122
  %v124 = vpop.f32.mrf.mxu0
  %v125 = vadd.f32 %v35, %v124
  %126 = vmatmul.bf16.gmra.mxu0 %v91
  %v127 = vpop.f32.mrf.mxu0
  %v128 = vadd.f32 %v35, %v127
  %v129 = vpop.f32.mrf.mxu0
  %v130 = vadd.f32 %v35, %v129
  %131 = vmatmul.bf16.gmra.mxu0 %v94
  %v132 = vpop.f32.mrf.mxu0
  %v133 = vadd.f32 %v35, %v132
  %v134 = vpop.f32.mrf.mxu0
  %v135 = vadd.f32 %v35, %v134
  %136 = vmatmul.bf16.gmra.mxu0 %v97
  %v137 = vpop.f32.mrf.mxu0
  %v138 = vadd.f32 %v35, %v137
  %v139 = vpop.f32.mrf.mxu0
  %v140 = vadd.f32 %v35, %v139
  %141 = vmatmul.bf16.gmra.mxu0 %v100
  %v142 = vpop.f32.mrf.mxu0
  %v143 = vadd.f32 %v35, %v142
  %v144 = vpop.f32.mrf.mxu0
  %v145 = vadd.f32 %v35, %v144
  %146 = vmatmul.bf16.gmra.mxu0 %v103
  %v147 = vpop.f32.mrf.mxu0
  %v148 = vadd.f32 %v35, %v147
  %v149 = vpop.f32.mrf.mxu0
  %v150 = vadd.f32 %v35, %v149
  %151 = vmatmul.bf16.gmra.mxu0 %v106
  %v152 = vpop.f32.mrf.mxu0
  %v153 = vadd.f32 %v35, %v152
  %v154 = vpop.f32.mrf.mxu0
  %v155 = vadd.f32 %v35, %v154
  %156 = vdwg.mxu0
  %vm157 = vcmask 64512
  %158 = vst.msk [vmem:[%s3] sm:$0xff] %vm157, %v118
  %159 = vst.msk [vmem:[%s3 + $0x8] sm:$0xff] %vm157, %v120
  %160 = vst.msk [vmem:[%s3 + $0x10] sm:$0xff] %vm157, %v123
  %161 = vst.msk [vmem:[%s3 + $0x18] sm:$0xff] %vm157, %v125
  %162 = vst.msk [vmem:[%s3 + $0x20] sm:$0xff] %vm157, %v128
  %163 = vst.msk [vmem:[%s3 + $0x28] sm:$0xff] %vm157, %v130
  %164 = vst.msk [vmem:[%s3 + $0x30] sm:$0xff] %vm157, %v133
  %165 = vst.msk [vmem:[%s3 + $0x38] sm:$0xff] %vm157, %v135
  %166 = vst.msk [vmem:[%s3 + $0x40] sm:$0xff] %vm157, %v138
  %167 = vst.msk [vmem:[%s3 + $0x48] sm:$0xff] %vm157, %v140
  %168 = vst.msk [vmem:[%s3 + $0x50] sm:$0xff] %vm157, %v143
  %169 = vst.msk [vmem:[%s3 + $0x58] sm:$0xff] %vm157, %v145
  %170 = vst.msk [vmem:[%s3 + $0x60] sm:$0xff] %vm157, %v148
  %171 = vst.msk [vmem:[%s3 + $0x68] sm:$0xff] %vm157, %v150
  %172 = vst.msk [vmem:[%s3 + $0x70] sm:$0xff] %vm157, %v153
  %173 = vst.msk [vmem:[%s3 + $0x78] sm:$0xff] %vm157, %v155
  // Predicated region
  $region14: #{tpu_custom_call.1} parent=0 // pred_check
    _
  $region15: #{tpu_custom_call.1} parent=0 // pred_check_branch
    %175 = sbr.rel (0) target = $region17
  $region16: #{tpu_custom_call.1} parent=0 // pred_region
    _
  $region17: #{tpu_custom_call.1} parent=0 // pred_fallthru
    _
  // Predicated region
  $region18: #{tpu_custom_call.1} parent=0 // pred_check
    _
  $region19: #{tpu_custom_call.1} parent=0 // pred_check_branch
    %177 = sbr.rel (0) target = $region21
  $region20: #{tpu_custom_call.1} parent=0 // pred_region
    _
  $region21: #{tpu_custom_call.1} parent=0 // pred_fallthru
    _

</llo_original>
